<compile_context>
chip_gen: v5e
topology: v5e:2x2
jax: 0.10.0
libtpu: 0.0.40
codegen_flags: <defaults>
</compile_context>

<pallas_src>
import functools

import jax
import jax.numpy as jnp
from jax.experimental import pallas as pl
from jax.experimental.pallas import tpu as pltpu


def _dense_gate_kernel(x_ref, w_ref, gates_ref, gsum_ref, glogg_ref, *,
                       n_total):
    i = pl.program_id(0)
    tile_n = x_ref.shape[0]
    num_experts = w_ref.shape[1]

    # ---- hot path: (tile_n, model_dim) @ (model_dim, E) on the MXU ----
    # Native dtype in (bf16 stays bf16 -> half the HBM traffic), f32 accumulate.
    logits = jnp.dot(x_ref[...], w_ref[...],
                     preferred_element_type=jnp.float32)       # (tile_n, E)

    m = jnp.max(logits, axis=-1, keepdims=True)
    e = jnp.exp(logits - m)
    denom = jnp.sum(e, axis=-1, keepdims=True)
    gates = e * pl.reciprocal(denom, approx=False)             # exact softmax
    gates_ref[...] = gates

    # ---- per-block partial reductions for the mutual-information loss ----
    # Rows past the true N (ragged last block) read padded garbage; mask them
    # out of both partial sums.  jnp.where does not propagate NaN/garbage from
    # the dead side into the selected value.
    row = i * tile_n + jax.lax.broadcasted_iota(jnp.int32, (tile_n, 1), 0)
    valid = row < n_total

    log_g = jnp.log(jnp.clip(gates, 1e-12, 1.0))               # matches torch.clamp
    g_valid = jnp.where(valid, gates, 0.0)
    glogg_valid = jnp.where(valid, gates * log_g, 0.0)

    gsum_ref[...] = jnp.sum(g_valid, axis=0).reshape(1, 1, num_experts)
    glogg_ref[...] = jnp.sum(glogg_valid, axis=0).reshape(1, 1, num_experts)


def dense_gate_forward(x, w_t, *, tile_n=512):
    """x: (N, model_dim), w_t: (model_dim, num_experts) = wg.weight.T.

    Returns (l_aux, combine_weights, None, None) matching the PyTorch module.
    """
    N, model_dim = x.shape
    num_experts = w_t.shape[1]

    # Clamp tile_n to a multiple of 8 that never exceeds the array extent
    # (block_shape row dim must be a multiple of 8 or equal the full dim).
    if N < 8:
        tile_n = N
    else:
        tile_n = min(tile_n, (N // 8) * 8)
        tile_n = max(8, (tile_n // 8) * 8)
    grid = pl.cdiv(N, tile_n)

    # VMEM budget: double-buffered x tiles + resident weight + gates out tiles
    # + tiny partials, with headroom.  Capped below v7x's 64 MiB physical VMEM.
    est = (2 * tile_n * model_dim * jnp.dtype(x.dtype).itemsize
           + 2 * model_dim * num_experts * jnp.dtype(w_t.dtype).itemsize
           + 2 * tile_n * num_experts * 4
           + 4 * 2 * num_experts * 4
           + (2 << 20))
    vmem_limit = int(min(max(est, 16 * 1024 * 1024), 56 * 1024 * 1024))

    kernel = functools.partial(_dense_gate_kernel, n_total=N)

    gates, gsum, glogg = pl.pallas_call(
        kernel,
        out_shape=(
            jax.ShapeDtypeStruct((N, num_experts), jnp.float32),
            jax.ShapeDtypeStruct((grid, 1, num_experts), jnp.float32),
            jax.ShapeDtypeStruct((grid, 1, num_experts), jnp.float32),
        ),
        grid_spec=pltpu.PrefetchScalarGridSpec(
            num_scalar_prefetch=0,
            grid=(grid,),
            in_specs=[
                pl.BlockSpec((tile_n, model_dim), lambda i: (i, 0)),
                pl.BlockSpec((model_dim, num_experts), lambda i: (0, 0)),
            ],
            out_specs=[
                pl.BlockSpec((tile_n, num_experts), lambda i: (i, 0)),
                pl.BlockSpec((1, 1, num_experts), lambda i: (i, 0, 0)),
                pl.BlockSpec((1, 1, num_experts), lambda i: (i, 0, 0)),
            ],
        ),
        compiler_params=pltpu.CompilerParams(
            # No cross-iteration state -> grid axis can be parallel
            # (megacore-sharded on v7x; harmless on v5e/v6e).
            dimension_semantics=("parallel",),
            vmem_limit_bytes=vmem_limit,
        ),
    )(x, w_t)

    # O(E) finish on the host-side graph: mutual-information loss.
    inv_n = 1.0 / float(N)
    avg_gate = jnp.sum(gsum[:, 0, :], axis=0) * inv_n          # (E,)
    p = jnp.clip(avg_gate, 1e-12, 1.0)
    entropy_avg = -jnp.sum(p * jnp.log(p))
    avg_entropy = -jnp.sum(glogg) * inv_n                      # mean row entropy
    l_aux = entropy_avg - avg_entropy
    return l_aux, gates, None, None


def dense_gate_ref(x, w_t):
    """Pure-JAX reference mirroring the PyTorch forward."""
    logits = x.astype(jnp.float32) @ w_t.astype(jnp.float32)
    gates = jax.nn.softmax(logits, axis=1)
    avg_gate = jnp.mean(gates, axis=0)
    p = jnp.clip(avg_gate, 1e-12, 1.0)
    entropy_avg = -jnp.sum(p * jnp.log(p))
    ent_per_sample = -jnp.sum(gates * jnp.log(jnp.clip(gates, 1e-12, 1.0)), axis=1)
    l_aux = entropy_avg - jnp.mean(ent_per_sample)
    return l_aux, gates


if __name__ == "__main__":
    # Small shapes implied by the forward: input is (batch*seq, model_dim).
    batch, seq, model_dim, num_experts = 2, 8, 32, 8
    N = batch * seq

    key = jax.random.PRNGKey(0)
    k_x, k_w = jax.random.split(key)
    x = jax.random.normal(k_x, (N, model_dim), dtype=jnp.float32)
    # nn.Linear(model_dim, num_experts).weight has shape (num_experts, model_dim);
    # we keep its transpose so the kernel computes x @ w_t directly.
    wg_weight = jax.random.normal(k_w, (num_experts, model_dim),
                                  dtype=jnp.float32) * (1.0 / jnp.sqrt(model_dim))
    w_t = wg_weight.T

    # --- f32 path (matches PyTorch's .float() matmul semantics) ---
    l_aux, combine_weights, _, _ = dense_gate_forward(x, w_t)
    jax.block_until_ready((l_aux, combine_weights))
    l_ref, g_ref = dense_gate_ref(x, w_t)
    assert jnp.allclose(combine_weights, g_ref, atol=1e-5, rtol=1e-5)
    assert jnp.allclose(l_aux, l_ref, atol=1e-5, rtol=1e-5)

    # --- ragged-N path: last block partially masked (N=40, tile_n=16) ---
    N2 = 40
    x2 = jax.random.normal(jax.random.PRNGKey(1), (N2, model_dim),
                           dtype=jnp.float32)
    l2, g2, _, _ = dense_gate_forward(x2, w_t, tile_n=16)
    jax.block_until_ready((l2, g2))
    l2r, g2r = dense_gate_ref(x2, w_t)
    assert jnp.allclose(g2, g2r, atol=1e-5, rtol=1e-5)
    assert jnp.allclose(l2, l2r, atol=1e-5, rtol=1e-5)

    # --- bf16 path: native bf16 feeds the MXU (half the HBM traffic) ---
    xb = x.astype(jnp.bfloat16)
    wb = w_t.astype(jnp.bfloat16)
    lb, gb, _, _ = dense_gate_forward(xb, wb)
    jax.block_until_ready((lb, gb))
    lbr, gbr = dense_gate_ref(xb.astype(jnp.float32), wb.astype(jnp.float32))
    assert jnp.allclose(gb, gbr, atol=2e-3, rtol=2e-3)
    assert jnp.allclose(lb, lbr, atol=2e-3, rtol=2e-3)

    print("KERNEL_OK")
</pallas_src>

<mosaic_0001>
module attributes {stable_mosaic.version = 11 : i64} {
  func.func @_dense_gate_kernel(%arg0: i32, %arg1: memref<16x32xf32, #tpu.memory_space<vmem>>, %arg2: memref<32x8xf32, #tpu.memory_space<vmem>>, %arg3: memref<16x8xf32, #tpu.memory_space<vmem>>, %arg4: memref<1x1x8xf32, #tpu.memory_space<vmem>>, %arg5: memref<1x1x8xf32, #tpu.memory_space<vmem>>) attributes {dimension_semantics = [#tpu.dimension_semantics<parallel>], iteration_bounds = array<i64: 1>, scalar_prefetch = 0 : i64, scratch_operands = 0 : i64, tpu.core_type = #tpu.core_type<tc>, window_params = [{transform_indices = @transform_0, window_bounds = array<i64: 16, 32>}, {pipeline_mode = #tpu.pipeline_mode<synchronous>, transform_indices = @transform_1, window_bounds = array<i64: 32, 8>}, {transform_indices = @transform_2, window_bounds = array<i64: 16, 8>}, {transform_indices = @transform_3, window_bounds = array<i64: 1, 1, 8>}, {transform_indices = @transform_4, window_bounds = array<i64: 1, 1, 8>}]} {
    %c0 = arith.constant 0 : index
    %c0_0 = arith.constant 0 : index
    %0 = vector.load %arg1[%c0, %c0_0] : memref<16x32xf32, #tpu.memory_space<vmem>>, vector<16x32xf32>
    %c0_1 = arith.constant 0 : index
    %c0_2 = arith.constant 0 : index
    %1 = vector.load %arg2[%c0_1, %c0_2] : memref<32x8xf32, #tpu.memory_space<vmem>>, vector<32x8xf32>
    %cst = arith.constant dense<0.000000e+00> : vector<16x8xf32>
    %2 = tpu.matmul %0, %1, %cst {dimension_numbers = #tpu.dot_dimension_numbers<[1], [0], [0], [1], [0, 0, 1, 1], [], []>} : vector<16x32xf32>, vector<32x8xf32>, vector<16x8xf32> -> vector<16x8xf32>
    %cst_3 = arith.constant dense<0xFF800000> : vector<16xf32>
    %3 = vector.multi_reduction <maximumf>, %2, %cst_3 [1] : vector<16x8xf32> to vector<16xf32>
    %4 = vector.shape_cast %3 : vector<16xf32> to vector<16x1xf32>
    %5 = vector.broadcast %4 : vector<16x1xf32> to vector<16x8xf32>
    %6 = arith.subf %2, %5 : vector<16x8xf32>
    %7 = math.exp %6 : vector<16x8xf32>
    %cst_4 = arith.constant dense<0.000000e+00> : vector<16xf32>
    %8 = vector.multi_reduction <add>, %7, %cst_4 [1] : vector<16x8xf32> to vector<16xf32>
    %9 = vector.shape_cast %8 : vector<16xf32> to vector<16x1xf32>
    %10 = tpu.reciprocal %9 : vector<16x1xf32> -> vector<16x1xf32>
    %11 = vector.broadcast %10 : vector<16x1xf32> to vector<16x8xf32>
    %12 = arith.mulf %7, %11 : vector<16x8xf32>
    %c0_5 = arith.constant 0 : index
    %c0_6 = arith.constant 0 : index
    %13 = vector.load %arg3[%c0_5, %c0_6] : memref<16x8xf32, #tpu.memory_space<vmem>>, vector<16x8xf32>
    tpu.vector_store %arg3[%c0_5, %c0_6], %12 {strides = array<i32>} : memref<16x8xf32, #tpu.memory_space<vmem>>, vector<16x8xf32>,
    %c16_i32 = arith.constant 16 : i32
    %14 = arith.muli %arg0, %c16_i32 : i32
    %15 = tpu.iota {dimensions = array<i32: 0>} : vector<16x1xi32>
    %16 = vector.broadcast %14 : i32 to vector<16x1xi32>
    %17 = arith.addi %16, %15 : vector<16x1xi32>
    %c16_i32_7 = arith.constant 16 : i32
    %18 = vector.broadcast %c16_i32_7 : i32 to vector<16x1xi32>
    %19 = arith.cmpi slt, %17, %18 : vector<16x1xi32>
    %cst_8 = arith.constant 9.99999996E-13 : f32
    %cst_9 = arith.constant 1.000000e+00 : f32
    %20 = vector.broadcast %cst_8 : f32 to vector<16x8xf32>
    %21 = arith.maximumf %20, %12 : vector<16x8xf32>
    %22 = vector.broadcast %cst_9 : f32 to vector<16x8xf32>
    %23 = arith.minimumf %22, %21 : vector<16x8xf32>
    %24 = math.log %23 : vector<16x8xf32>
    %cst_10 = arith.constant 0.000000e+00 : f32
    %25 = vector.shape_cast %19 : vector<16x1xi1> to vector<16x1xi1>
    %26 = vector.broadcast %25 : vector<16x1xi1> to vector<16x8xi1>
    %27 = vector.broadcast %cst_10 : f32 to vector<16x8xf32>
    %28 = arith.select %26, %12, %27 : vector<16x8xi1>, vector<16x8xf32>
    %29 = arith.mulf %12, %24 : vector<16x8xf32>
    %cst_11 = arith.constant 0.000000e+00 : f32
    %30 = vector.shape_cast %19 : vector<16x1xi1> to vector<16x1xi1>
    %31 = vector.broadcast %30 : vector<16x1xi1> to vector<16x8xi1>
    %32 = vector.broadcast %cst_11 : f32 to vector<16x8xf32>
    %33 = arith.select %31, %29, %32 : vector<16x8xi1>, vector<16x8xf32>
    %cst_12 = arith.constant dense<0.000000e+00> : vector<8xf32>
    %34 = vector.multi_reduction <add>, %28, %cst_12 [0] : vector<16x8xf32> to vector<8xf32>
    %35 = vector.shape_cast %34 : vector<8xf32> to vector<1x1x8xf32>
    %c0_13 = arith.constant 0 : index
    %c0_14 = arith.constant 0 : index
    %c0_15 = arith.constant 0 : index
    %36 = vector.load %arg4[%c0_13, %c0_14, %c0_15] : memref<1x1x8xf32, #tpu.memory_space<vmem>>, vector<1x1x8xf32>
    tpu.vector_store %arg4[%c0_13, %c0_14, %c0_15], %35 {strides = array<i32>} : memref<1x1x8xf32, #tpu.memory_space<vmem>>, vector<1x1x8xf32>,
    %cst_16 = arith.constant dense<0.000000e+00> : vector<8xf32>
    %37 = vector.multi_reduction <add>, %33, %cst_16 [0] : vector<16x8xf32> to vector<8xf32>
    %38 = vector.shape_cast %37 : vector<8xf32> to vector<1x1x8xf32>
    %c0_17 = arith.constant 0 : index
    %c0_18 = arith.constant 0 : index
    %c0_19 = arith.constant 0 : index
    %39 = vector.load %arg5[%c0_17, %c0_18, %c0_19] : memref<1x1x8xf32, #tpu.memory_space<vmem>>, vector<1x1x8xf32>
    tpu.vector_store %arg5[%c0_17, %c0_18, %c0_19], %38 {strides = array<i32>} : memref<1x1x8xf32, #tpu.memory_space<vmem>>, vector<1x1x8xf32>,
    return
  }
  func.func @transform_0(%arg0: i32) -> (i32, i32) {
    %c0_i32 = arith.constant 0 : i32
    %c0_i32_0 = arith.constant 0 : i32
    return %arg0, %c0_i32 : i32, i32
  }
  func.func @transform_1(%arg0: i32) -> (i32, i32) {
    %c0_i32 = arith.constant 0 : i32
    %c0_i32_0 = arith.constant 0 : i32
    %c0_i32_1 = arith.constant 0 : i32
    return %c0_i32, %c0_i32_0 : i32, i32
  }
  func.func @transform_2(%arg0: i32) -> (i32, i32) {
    %c0_i32 = arith.constant 0 : i32
    %c0_i32_0 = arith.constant 0 : i32
    return %arg0, %c0_i32 : i32, i32
  }
  func.func @transform_3(%arg0: i32) -> (i32, i32, i32) {
    %c0_i32 = arith.constant 0 : i32
    %c0_i32_0 = arith.constant 0 : i32
    %c0_i32_1 = arith.constant 0 : i32
    return %arg0, %c0_i32, %c0_i32_0 : i32, i32, i32
  }
  func.func @transform_4(%arg0: i32) -> (i32, i32, i32) {
    %c0_i32 = arith.constant 0 : i32
    %c0_i32_0 = arith.constant 0 : i32
    %c0_i32_1 = arith.constant 0 : i32
    return %arg0, %c0_i32, %c0_i32_0 : i32, i32, i32
  }
}

</mosaic_0001>

<llo_original>
// kernel: tpu_custom_call.1
$region0: #{tpu_custom_call.1}
  #allocation0 [shape = 'u32[]', space=smem, size = 0x4, offset = 0x4, fixed_abs, tag = 'smem constant byte address 0x4 - core index']
  #allocation1 [shape = 'u32[72,128]{1,0:T(1,128)}', space=vmem, size = 0x9000, scoped, tag = 'internal scratch']
  %s0 = inlined_call_operand.vmem [shape: f32[16,32], index: 0, kind: input, shape index: {}]
  %s1 = inlined_call_operand.vmem [shape: f32[32,8], index: 1, kind: input, shape index: {}]
  %s2 = inlined_call_operand.vmem [shape: f32[16,8], index: 2, kind: output, shape index: {0}]
  %s3 = inlined_call_operand.hbm [shape: f32[1,1,8], index: 3, kind: output, shape index: {1}]
  %s4 = inlined_call_operand.hbm [shape: f32[1,1,8], index: 4, kind: output, shape index: {2}]
  %5 = xla_tuple %s2, %s3, %s4
  %s6 = sld [smem:[#allocation0]]
  $region34: #{tpu_custom_call.1} parent=0
    _
  %s8 = ssub.s32 1, %s6
  %s9 = scalar_select 0, %s8, %s6
  $region1: #{tpu_custom_call.1} parent=0
    #allocation2 [shape = 'u8[512]{0}', space=vmem, size = 0x400, scoped, tag = 'output window, operand 1, single buffered']
    #allocation3 [shape = 's32[1]{0}', space=sflag, size = 0x4, scoped, tag = 'scoped memory for tpu_custom_call.1']
    #allocation4 [shape = 'u8[512]{0}', space=vmem, size = 0x400, scoped, tag = 'output window, operand 2, single buffered']
    #allocation5 [shape = 's32[1]{0}', space=sflag, size = 0x4, scoped, tag = 'scoped memory for tpu_custom_call.1']
    %10 = vsyncpa [#allocation3], 0
    %11 = vsyncpa [#allocation5], 0
    // Predicated region
    $region2: #{tpu_custom_call.1} parent=1 // pred_check
      _
    $region3: #{tpu_custom_call.1} parent=1 // pred_check_branch
      %13 = sbr.rel (0) target = $region5
    $region4: #{tpu_custom_call.1} parent=1 // pred_region
      _
    $region5: #{tpu_custom_call.1} parent=1 // pred_fallthru
      _
    // Predicated region
    $region6: #{tpu_custom_call.1} parent=1 // pred_check
      _
    $region7: #{tpu_custom_call.1} parent=1 // pred_check_branch
      %15 = sbr.rel (0) target = $region9
    $region8: #{tpu_custom_call.1} parent=1 // pred_region
      _
    $region9: #{tpu_custom_call.1} parent=1 // pred_fallthru
      _
    %v16 = vld [vmem:[%s0] sm:$0xff]
    %v17 = vld [vmem:[%s0 + $0x8] sm:$0xff]
    %v18 = vld [vmem:[%s1] sm:$0xff]
    %v19 = vld [vmem:[%s1 + $0x8] sm:$0xff]
    %v20 = vld [vmem:[%s1 + $0x10] sm:$0xff]
    %v21 = vld [vmem:[%s1 + $0x18] sm:$0xff]
    %vm22 = vcmask 261120
    %v24 = vsel %vm22, %v16, 0
    %v27 = vsel %vm22, %v17, 0
    %29 = vmatpush.msra.mxu0 0.0
    %30 = vmatpush.msra.mxu0 0.0
    %31 = vmatpush.msra.mxu0 0.0
    %32 = vmatpush.msra.mxu0 0.0
    %33 = vmatpush.msra.mxu0 0.0
    %34 = vmatpush.msra.mxu0 0.0
    %35 = vmatpush.msra.mxu0 0.0
    %36 = vmatpush.msra.mxu0 0.0
    %37 = vmatpush.msra.mxu0 0.0
    %38 = vmatpush.msra.mxu0 0.0
    %39 = vmatpush.msra.mxu0 0.0
    %40 = vmatpush.msra.mxu0 0.0
    %41 = vmatpush.msra.mxu0 %v21
    %42 = vmatpush.msra.mxu0 %v20
    %43 = vmatpush.msra.mxu0 %v19
    %44 = vmatpush.msra.mxu0 %v18
    %45 = vmatmul.f32.gmra.mxu0 %v24
    %v46 = vpop.f32.mrf.mxu0
    %v47 = vadd.f32 0.0, %v46
    %48 = vmatmul.f32.gmra.mxu0 %v27
    %v49 = vpop.f32.mrf.mxu0
    %v50 = vadd.f32 0.0, %v49
    %51 = vdwg.mxu0
    %vm52 = vcmask 64512
    %v53 = vsel %vm52, %v47, -inf
    %54 = vmax.xlane.f32.xlu0 %v53
    %v55 = vpop.xlane.xlu0 %54
    %v56 = vsel %vm52, %v50, -inf
    %57 = vmax.xlane.f32.xlu0 %v56
    %v58 = vpop.xlane.xlu0 %57
    %v59 = vsub.f32 %v47, %v55
    %v60 = vsub.f32 %v50, %v58
    %v61 = vmul.f32 %v59, 1.442695
    %v62 = vpow.pop %v61
    %v63 = vmul.f32 %v60, 1.442695
    %v64 = vpow.pop %v63
    %v65 = vsel %vm52, %v62, 0.0
    %66 = vadd.xlane.f32.xlu0 %v65
    %v67 = vpop.xlane.xlu0 %66
    %v68 = vsel %vm52, %v64, 0.0
    %69 = vadd.xlane.f32.xlu0 %v68
    %v70 = vpop.xlane.xlu0 %69
    %v71 = vrcp.pop %v67
    %v72 = vmul.f32 %v67, %v71
    %v73 = vsub.f32 1.0, %v72
    %v74 = vmul.f32 %v71, %v73
    %v75 = vadd.f32 %v71, %v74
    %vm76 = vweird.f32 %v67
    %vm77 = vweird.f32 %v71
    %vm78 = vmor %vm76, %vm77
    %v79 = vsel %vm78, %v71, %v75
    %v80 = vand.u32 2147483647, %v67
    %vm81 = vcmp.eq.f32.partialorder %v80, 8.507059e+37
    %v82 = vand.u32 %v67, 2147483648
    %v83 = vor.u32 1.1754944e-38, %v82
    %v84 = vsel %vm81, %v83, %v79
    %v85 = vrcp.pop %v70
    %v86 = vmul.f32 %v70, %v85
    %v87 = vsub.f32 1.0, %v86
    %v88 = vmul.f32 %v85, %v87
    %v89 = vadd.f32 %v85, %v88
    %vm90 = vweird.f32 %v70
    %vm91 = vweird.f32 %v85
    %vm92 = vmor %vm90, %vm91
    %v93 = vsel %vm92, %v85, %v89
    %v94 = vand.u32 2147483647, %v70
    %vm95 = vcmp.eq.f32.partialorder %v94, 8.507059e+37
    %v96 = vand.u32 %v70, 2147483648
    %v97 = vor.u32 1.1754944e-38, %v96
    %v98 = vsel %vm95, %v97, %v93
    %v99 = vmul.f32 %v62, %v84
    %v100 = vmul.f32 %v64, %v98
    %101 = vst.msk [vmem:[%s2] sm:$0xff] %vm52, %v99
    %102 = vst.msk [vmem:[%s2 + $0x8] sm:$0xff] %vm52, %v100
    %s103 = smul.u32 0, 16
    %v104 = vlaneseq
    %v105 = vshrl.u32 %v104, 7
    %v106 = vadd.s32 %v105, 8
    %v107 = vstv %s103
    %v108 = vadd.s32 %v107, %v105
    %v109 = vadd.s32 %v107, %v106
    %vm110 = vcmp.lt.s32.totalorder %v108, 16
    %vm111 = vcmp.lt.s32.totalorder %v109, 16
    %v112 = vmax.f32 %v99, 1e-12
    %v113 = vmax.f32 %v100, 1e-12
    %v114 = vmin.f32 %v112, 1.0
    %v115 = vmin.f32 %v113, 1.0
    %v116 = vlog2.pop %v114
    %v117 = vmul.f32 %v116, 0.6931472
    %v118 = vlog2.pop %v115
    %v119 = vmul.f32 %v118, 0.6931472
    %v120 = vsel %vm110, 1, 0
    %v121 = vsel %vm111, 1, 0
    %vm122 = vcmp.eq.s32.totalorder %v120, 1
    %vm123 = vcmp.eq.s32.totalorder %v121, 1
    %v124 = vsel %vm122, %v99, 0.0
    %v125 = vsel %vm123, %v100, 0.0
    %v126 = vmul.f32 %v99, %v117
    %v127 = vmul.f32 %v100, %v119
    %v128 = vsel %vm122, %v126, 0.0
    %v129 = vsel %vm123, %v127, 0.0
    %v130 = vsel %vm52, %v124, 0.0
    %v131 = vsel %vm52, %v125, 0.0
    %v132 = vadd.f32 %v130, %v131
    %v133 = vrot.slane %v132, 4
    %v134 = vadd.f32 %v132, %v133
    %v135 = vrot.slane %v134, 2
    %v136 = vadd.f32 %v134, %v135
    %v137 = vrot.slane %v136, 1
    %v138 = vadd.f32 %v136, %v137
    %vm139 = vcmask 57344
    %140 = vst.msk [vmem:[#allocation2] sm:$0x1] %vm139, %v138
    %v141 = vsel %vm52, %v128, 0.0
    %v142 = vsel %vm52, %v129, 0.0
    %v143 = vadd.f32 %v141, %v142
    %v144 = vrot.slane %v143, 4
    %v145 = vadd.f32 %v143, %v144
    %v146 = vrot.slane %v145, 2
    %v147 = vadd.f32 %v145, %v146
    %v148 = vrot.slane %v147, 1
    %v149 = vadd.f32 %v147, %v148
    %150 = vst.msk [vmem:[#allocation4] sm:$0x1] %vm139, %v149
    // Predicated region
    $region10: #{tpu_custom_call.1} parent=1 // pred_check
      _
    $region11: #{tpu_custom_call.1} parent=1 // pred_check_branch
      %152 = sbr.rel (0) target = $region13
    $region12: #{tpu_custom_call.1} parent=1 // pred_region
      _
    $region13: #{tpu_custom_call.1} parent=1 // pred_fallthru
      _
    // Predicated region
    $region14: #{tpu_custom_call.1} parent=1 // pred_check
      _
    $region15: #{tpu_custom_call.1} parent=1 // pred_check_branch
      %154 = sbr.rel (0) target = $region17
    $region16: #{tpu_custom_call.1} parent=1 // pred_region
      %156 = vsyncadd [#allocation3], 0
      %s158 = sshll.u32 [#allocation2], 4
      %s159 = int_to_ptr.vmem [resolvable:$true] %s158
      %s160 = sshll.u32 %s3, 4
      %s161 = int_to_ptr.hbm [resolvable:$true] %s160
      %163 = dma.vmem_to_hbm [thread:$0]  %s159, 16, %s161, [#allocation3]
    $region17: #{tpu_custom_call.1} parent=1 // pred_fallthru
      _
    // Predicated region
    $region18: #{tpu_custom_call.1} parent=1 // pred_check
      _
    $region19: #{tpu_custom_call.1} parent=1 // pred_check_branch
      %165 = sbr.rel (0) target = $region21
    $region20: #{tpu_custom_call.1} parent=1 // pred_region
      %167 = vsyncadd [#allocation5], 0
      %s169 = sshll.u32 [#allocation4], 4
      %s170 = int_to_ptr.vmem [resolvable:$true] %s169
      %s171 = sshll.u32 %s4, 4
      %s172 = int_to_ptr.hbm [resolvable:$true] %s171
      %174 = dma.vmem_to_hbm [thread:$0]  %s170, 16, %s172, [#allocation5]
    $region21: #{tpu_custom_call.1} parent=1 // pred_fallthru
      _
    // Predicated region
    $region22: #{tpu_custom_call.1} parent=1 // pred_check
      _
    $region23: #{tpu_custom_call.1} parent=1 // pred_check_branch
      %176 = sbr.rel (0) target = $region25
    $region24: #{tpu_custom_call.1} parent=1 // pred_region
      _
    $region25: #{tpu_custom_call.1} parent=1 // pred_fallthru
      _
    // Predicated region
    $region26: #{tpu_custom_call.1} parent=1 // pred_check
      _
    $region27: #{tpu_custom_call.1} parent=1 // pred_check_branch
      %178 = sbr.rel (0) target = $region29
    $region28: #{tpu_custom_call.1} parent=1 // pred_region
      %180 = dma.done [#allocation3], 16
    $region29: #{tpu_custom_call.1} parent=1 // pred_fallthru
      _
    // Predicated region
    $region30: #{tpu_custom_call.1} parent=1 // pred_check
      _
    $region31: #{tpu_custom_call.1} parent=1 // pred_check_branch
      %182 = sbr.rel (0) target = $region33
    $region32: #{tpu_custom_call.1} parent=1 // pred_region
      %184 = dma.done [#allocation5], 16
    $region33: #{tpu_custom_call.1} parent=1 // pred_fallthru
      _
    %185 = vsyncpa [#allocation3], 1
    %186 = vsyncpa [#allocation5], 1

</llo_original>
